<compile_context>
chip_gen: v7x
topology: tpu7x:2x2x1
jax: 0.10.0
libtpu: 0.0.40
codegen_flags: <defaults>
</compile_context>

<pallas_src>
import math
from functools import partial

import jax
import jax.numpy as jnp
from jax import lax
from jax.experimental import pallas as pl
from jax.experimental.pallas import tpu as pltpu


def _round_up(n, m):
    return (n + m - 1) // m * m


# ----------------------------- Pallas kernel ------------------------------ #
def _proj_kernel(x_ref, w_ref, b_ref, o_ref):
    """One (tm, tn) output tile: full-K MXU matmul + bias, f32 accumulation."""
    o_ref[...] = (
        jnp.dot(x_ref[...], w_ref[...], preferred_element_type=jnp.float32)
        + b_ref[...]
    ).astype(o_ref.dtype)


def patch_projection_matmul(patches, weight_2d, bias, *,
                            compute_dtype=jnp.bfloat16, out_dtype=None):
    """patches: (M, K), weight_2d: (K, E), bias: (E,)  ->  (M, E).

    Pads M/K/E to TPU-friendly multiples, runs a bias-fused GEMM tiled over
    (M, N) with the whole K reduction resident per tile, then slices the
    padding back off.
    """
    M, K = patches.shape
    K2, E = weight_2d.shape
    assert K == K2, (K, K2)
    out_dtype = out_dtype or patches.dtype

    # ---- tile sizes / padding (generation-aware) --------------------------
    # K: lane-dense reduction (zero rows/cols contribute nothing to the dot).
    K_pad = _round_up(K, 128)
    # N: 256-wide tiles match the v6e/v7x 2x256x256 MXU; 128 is enough for
    #    small embed_dims (and is fine on v5e's 4x128x128 MXU).
    tn = 256 if E >= 256 else 128
    E_pad = _round_up(E, tn)
    # M: 256-row tiles give the pipeline a real steady state at ViT sizes
    #    while staying far under the v7x 64 MiB VMEM budget; small problems
    #    collapse to a single sublane-aligned tile.
    tm = min(256, _round_up(M, 8))
    M_pad = _round_up(M, tm)

    if (M_pad, K_pad) != (M, K):
        patches = jnp.pad(patches, ((0, M_pad - M), (0, K_pad - K)))
    if (K_pad, E_pad) != (K, E):
        weight_2d = jnp.pad(weight_2d, ((0, K_pad - K), (0, E_pad - E)))
    if E_pad != E:
        bias = jnp.pad(bias, ((0, E_pad - E),))

    patches = patches.astype(compute_dtype)          # bf16 operands, f32 acc
    weight_2d = weight_2d.astype(compute_dtype)
    bias_2d = bias.reshape(1, E_pad).astype(jnp.float32)

    grid = (M_pad // tm, E_pad // tn)
    # TODO(synk): for very large K (>~8K) or exposed patch-DMA, re-introduce a
    # trailing "arbitrary" K axis / pipeline_mode=pl.Buffered(3) on patches.
    out = pl.pallas_call(
        _proj_kernel,
        out_shape=jax.ShapeDtypeStruct((M_pad, E_pad), out_dtype),
        grid_spec=pltpu.PrefetchScalarGridSpec(
            num_scalar_prefetch=0,
            grid=grid,
            in_specs=[
                pl.BlockSpec((tm, K_pad), lambda i, j: (i, 0)),   # patches
                pl.BlockSpec((K_pad, tn), lambda i, j: (0, j)),   # weight
                pl.BlockSpec((1, tn), lambda i, j: (0, j)),       # bias
            ],
            out_specs=pl.BlockSpec((tm, tn), lambda i, j: (i, j)),
        ),
        compiler_params=pltpu.CompilerParams(
            # Both axes independent -> shardable across v7x's two TensorCores.
            dimension_semantics=("parallel", "parallel"),
            # Let XLA fuse the patchify reshape/transpose/cast into the input
            # DMA of operand 0 instead of materializing (M, K) in HBM.
            allow_input_fusion=[True, False, False],
        ),
    )(patches, weight_2d, bias_2d)

    return out[:M, :E]


# --------------------------- PatchEmbed wrapper ---------------------------- #
def adaptive_corner_pad(x, kernel_size, stride, dilation=(1, 1)):
    """AdaptivePadding(padding='corner'): zero-pad bottom/right."""
    B, C, H, W = x.shape
    kh, kw = kernel_size
    sh, sw = stride
    dh, dw = dilation
    out_h = math.ceil(H / sh)
    out_w = math.ceil(W / sw)
    pad_h = max((out_h - 1) * sh + (kh - 1) * dh + 1 - H, 0)
    pad_w = max((out_w - 1) * sw + (kw - 1) * dw + 1 - W, 0)
    if pad_h > 0 or pad_w > 0:
        x = jnp.pad(x, ((0, 0), (0, 0), (0, pad_h), (0, pad_w)))
    return x


def patch_embed_forward(x, weight, bias, *, kernel_size,
                        compute_dtype=jnp.bfloat16):
    """Forward pass of PatchEmbed (stride=kernel_size, padding='corner',
    dilation=1, bias=True, norm_cfg=None).

    x:      (B, C, H, W)
    weight: (E, C, kh, kw)   (torch Conv2d OIHW layout)
    bias:   (E,)
    returns (out, (out_h, out_w)) with out: (B, out_h*out_w, E)
    """
    kh, kw = kernel_size
    E, C, _, _ = weight.shape

    # 1. adaptive "corner" padding
    x = adaptive_corner_pad(x, (kh, kw), (kh, kw))
    B, _, Hp, Wp = x.shape
    out_h, out_w = Hp // kh, Wp // kw

    # 2. patchify: (B, C, Hp, Wp) -> (B*out_h*out_w, C*kh*kw)
    #    inner ordering (C, kh, kw) matches torch Conv2d weight flattening.
    #    (The transpose is fused into the kernel's input DMA via
    #     allow_input_fusion.)
    patches = x.reshape(B, C, out_h, kh, out_w, kw)
    patches = patches.transpose(0, 2, 4, 1, 3, 5)            # (B, oh, ow, C, kh, kw)
    patches = patches.reshape(B * out_h * out_w, C * kh * kw)

    # 3. Pallas bias-fused GEMM: patches @ W^T + b
    w2d = weight.reshape(E, C * kh * kw).T                    # (K, E)
    out = patch_projection_matmul(patches, w2d, bias,
                                  compute_dtype=compute_dtype,
                                  out_dtype=x.dtype)

    # 4. (B, L, E)  ==  torch: conv -> flatten(2) -> transpose(1, 2)
    out = out.reshape(B, out_h * out_w, E)
    return out, (out_h, out_w)


# ------------------------------ reference ---------------------------------- #
def reference_patch_embed(x, weight, bias, kernel_size):
    """Plain XLA conv reference (exact module semantics, f32)."""
    kh, kw = kernel_size
    E = weight.shape[0]
    xp = adaptive_corner_pad(x, (kh, kw), (kh, kw))
    y = lax.conv_general_dilated(
        xp, weight, window_strides=(kh, kw), padding="VALID",
        dimension_numbers=("NCHW", "OIHW", "NCHW"),
    ) + bias.reshape(1, E, 1, 1)
    B, _, oh, ow = y.shape
    return y.reshape(B, E, oh * ow).transpose(0, 2, 1), (oh, ow)


# --------------------------------- main ------------------------------------ #
if __name__ == "__main__":
    # Small synthetic configuration consistent with PatchEmbed:
    #   in_channels=4, embed_dims=32, kernel_size=8 (stride=kernel),
    #   padding='corner', dilation=1, bias=True, norm_cfg=None.
    B, C, H, W = 2, 4, 16, 16
    E = 32
    K_SIZE = (8, 8)

    key = jax.random.PRNGKey(0)
    kx, kw_, kb = jax.random.split(key, 3)
    x = jax.random.normal(kx, (B, C, H, W), dtype=jnp.float32)
    weight = (jax.random.normal(kw_, (E, C, K_SIZE[0], K_SIZE[1]),
                                dtype=jnp.float32)
              * (1.0 / math.sqrt(C * K_SIZE[0] * K_SIZE[1])))
    bias = jax.random.normal(kb, (E,), dtype=jnp.float32) * 0.02

    # --- primary path: bf16 MXU operands, f32 accumulation ------------------
    fwd_bf16 = jax.jit(partial(patch_embed_forward, kernel_size=K_SIZE,
                               compute_dtype=jnp.bfloat16))
    out, out_size = fwd_bf16(x, weight, bias)
    out = jax.block_until_ready(out)
    osz = tuple(int(s) for s in out_size)

    ref, ref_size = reference_patch_embed(x, weight, bias, K_SIZE)
    assert out.shape == (B, osz[0] * osz[1], E), out.shape
    assert osz == ref_size == (H // K_SIZE[0], W // K_SIZE[1]), (osz, ref_size)
    assert jnp.allclose(out, ref, atol=2e-2, rtol=2e-2), "bf16 path mismatch"

    # --- secondary path: f32 operands, odd H/W (exercises 'corner' padding) -
    # --- and C=3 -> K=192 (not a multiple of 128, exercises K padding). -----
    C2, H2, W2 = 3, 15, 15
    x2 = jax.random.normal(kx, (B, C2, H2, W2), dtype=jnp.float32)
    w2 = (jax.random.normal(kw_, (E, C2, K_SIZE[0], K_SIZE[1]),
                            dtype=jnp.float32)
          * (1.0 / math.sqrt(C2 * K_SIZE[0] * K_SIZE[1])))
    fwd_f32 = jax.jit(partial(patch_embed_forward, kernel_size=K_SIZE,
                              compute_dtype=jnp.float32))
    out2, out2_size = fwd_f32(x2, w2, bias)
    out2 = jax.block_until_ready(out2)
    osz2 = tuple(int(s) for s in out2_size)

    ref2, ref2_size = reference_patch_embed(x2, w2, bias, K_SIZE)
    assert osz2 == ref2_size == (2, 2), (osz2, ref2_size)
    assert out2.shape == (B, 4, E), out2.shape
    assert jnp.allclose(out2, ref2, atol=1e-4, rtol=1e-4), "f32 path mismatch"

    print("KERNEL_OK")
</pallas_src>

<mosaic_0001>
module attributes {stable_mosaic.version = 11 : i64} {
  func.func @_proj_kernel(%arg0: i32, %arg1: i32, %arg2: memref<8x256xbf16, #tpu.memory_space<vmem>>, %arg3: memref<256x128xbf16, #tpu.memory_space<vmem>>, %arg4: memref<1x128xf32, #tpu.memory_space<vmem>>, %arg5: memref<8x128xf32, #tpu.memory_space<vmem>>) attributes {dimension_semantics = [#tpu.dimension_semantics<parallel>, #tpu.dimension_semantics<parallel>], iteration_bounds = array<i64: 1, 1>, scalar_prefetch = 0 : i64, scratch_operands = 0 : i64, tpu.core_type = #tpu.core_type<tc>, window_params = [{transform_indices = @transform_0, window_bounds = array<i64: 8, 256>}, {transform_indices = @transform_1, window_bounds = array<i64: 256, 128>}, {transform_indices = @transform_2, window_bounds = array<i64: 1, 128>}, {transform_indices = @transform_3, window_bounds = array<i64: 8, 128>}]} {
    %c0 = arith.constant 0 : index
    %c0_0 = arith.constant 0 : index
    %0 = vector.load %arg2[%c0, %c0_0] : memref<8x256xbf16, #tpu.memory_space<vmem>>, vector<8x256xbf16>
    %c0_1 = arith.constant 0 : index
    %c0_2 = arith.constant 0 : index
    %1 = vector.load %arg3[%c0_1, %c0_2] : memref<256x128xbf16, #tpu.memory_space<vmem>>, vector<256x128xbf16>
    %cst = arith.constant dense<0.000000e+00> : vector<8x128xf32>
    %2 = tpu.matmul %0, %1, %cst {dimension_numbers = #tpu.dot_dimension_numbers<[1], [0], [0], [1], [0, 0, 1, 1], [], []>} : vector<8x256xbf16>, vector<256x128xbf16>, vector<8x128xf32> -> vector<8x128xf32>
    %c0_3 = arith.constant 0 : index
    %c0_4 = arith.constant 0 : index
    %3 = vector.load %arg4[%c0_3, %c0_4] : memref<1x128xf32, #tpu.memory_space<vmem>>, vector<1x128xf32>
    %4 = vector.broadcast %3 : vector<1x128xf32> to vector<8x128xf32>
    %5 = arith.addf %2, %4 : vector<8x128xf32>
    %c0_5 = arith.constant 0 : index
    %c0_6 = arith.constant 0 : index
    %6 = vector.load %arg5[%c0_5, %c0_6] : memref<8x128xf32, #tpu.memory_space<vmem>>, vector<8x128xf32>
    tpu.vector_store %arg5[%c0_5, %c0_6], %5 {strides = array<i32>} : memref<8x128xf32, #tpu.memory_space<vmem>>, vector<8x128xf32>,
    return
  }
  func.func @transform_0(%arg0: i32, %arg1: i32) -> (i32, i32) {
    %c0_i32 = arith.constant 0 : i32
    %c0_i32_0 = arith.constant 0 : i32
    return %arg0, %c0_i32 : i32, i32
  }
  func.func @transform_1(%arg0: i32, %arg1: i32) -> (i32, i32) {
    %c0_i32 = arith.constant 0 : i32
    %c0_i32_0 = arith.constant 0 : i32
    return %c0_i32, %arg1 : i32, i32
  }
  func.func @transform_2(%arg0: i32, %arg1: i32) -> (i32, i32) {
    %c0_i32 = arith.constant 0 : i32
    %c0_i32_0 = arith.constant 0 : i32
    return %c0_i32, %arg1 : i32, i32
  }
  func.func @transform_3(%arg0: i32, %arg1: i32) -> (i32, i32) {
    %c0_i32 = arith.constant 0 : i32
    return %arg0, %arg1 : i32, i32
  }
}

</mosaic_0001>

<llo_original>
// kernel: patch_embed_forward.1
$region0: #{patch_embed_forward.1}
  #allocation0 [shape = 'u32[]', space=smem, size = 0x4, offset = 0x4, fixed_abs, tag = 'smem constant byte address 0x4 - core index']
  #allocation1 [shape = 'u32[144,128]{1,0:T(1,128)}', space=vmem, size = 0x12000, scoped, tag = 'internal scratch']
  %s0 = inlined_call_operand.vmem [shape: bf16[8,256], index: 0, kind: input, shape index: {}]
  %s1 = inlined_call_operand.vmem [shape: bf16[256,128], index: 1, kind: input, shape index: {}]
  %s2 = inlined_call_operand.vmem [shape: f32[1,128], index: 2, kind: input, shape index: {}]
  %s3 = inlined_call_operand.hbm [shape: f32[8,128], index: 3, kind: output, shape index: {}]
  %s4 = sld [smem:[#allocation0]]
  $region22: #{patch_embed_forward.1} parent=0
    _
  %s6 = ssub.s32 1, %s4
  %s7 = scalar_select 0, %s6, %s4
  $region1: #{patch_embed_forward.1} parent=0
    #allocation2 [shape = 'u8[4096]{0}', space=vmem, size = 0x1000, scoped, tag = 'output window, operand 0, single buffered']
    #allocation3 [shape = 's32[1]{0}', space=sflag, size = 0x4, scoped, tag = 'scoped memory for patch_embed_forward.1']
    %8 = vsyncpa [#allocation3], 0
    // Predicated region
    $region2: #{patch_embed_forward.1} parent=1 // pred_check
      _
    $region3: #{patch_embed_forward.1} parent=1 // pred_check_branch
      %10 = sbr.rel (0) target = $region5
    $region4: #{patch_embed_forward.1} parent=1 // pred_region
      _
    $region5: #{patch_embed_forward.1} parent=1 // pred_fallthru
      _
    // Predicated region
    $region6: #{patch_embed_forward.1} parent=1 // pred_check
      _
    $region7: #{patch_embed_forward.1} parent=1 // pred_check_branch
      %12 = sbr.rel (0) target = $region9
    $region8: #{patch_embed_forward.1} parent=1 // pred_region
      _
    $region9: #{patch_embed_forward.1} parent=1 // pred_fallthru
      _
    // Predicated region
    $region10: #{patch_embed_forward.1} parent=1 // pred_check
      _
    $region11: #{patch_embed_forward.1} parent=1 // pred_check_branch
      %14 = sbr.rel (0) target = $region13
    $region12: #{patch_embed_forward.1} parent=1 // pred_region
      _
    $region13: #{patch_embed_forward.1} parent=1 // pred_fallthru
      _
    %v16 = vld [vmem:[%s0] sm:$0xff]
    %v17 = vld [vmem:[%s1] sm:$0xf]
    %v18 = vld [vmem:[%s1 + $0x4] sm:$0xf]
    %v19 = vld [vmem:[%s1 + $0x8] sm:$0xf]
    %v20 = vld [vmem:[%s1 + $0xc] sm:$0xf]
    %v21 = vld [vmem:[%s1 + $0x10] sm:$0xf]
    %v22 = vld [vmem:[%s1 + $0x14] sm:$0xf]
    %v23 = vld [vmem:[%s1 + $0x18] sm:$0xf]
    %v24 = vld [vmem:[%s1 + $0x1c] sm:$0xf]
    %v25 = vld [vmem:[%s1 + $0x20] sm:$0xf]
    %v26 = vld [vmem:[%s1 + $0x24] sm:$0xf]
    %v27 = vld [vmem:[%s1 + $0x28] sm:$0xf]
    %v28 = vld [vmem:[%s1 + $0x2c] sm:$0xf]
    %v29 = vld [vmem:[%s1 + $0x30] sm:$0xf]
    %v30 = vld [vmem:[%s1 + $0x34] sm:$0xf]
    %v31 = vld [vmem:[%s1 + $0x38] sm:$0xf]
    %v32 = vld [vmem:[%s1 + $0x3c] sm:$0xf]
    %v33 = vld [vmem:[%s1 + $0x40] sm:$0xf]
    %v34 = vld [vmem:[%s1 + $0x44] sm:$0xf]
    %v35 = vld [vmem:[%s1 + $0x48] sm:$0xf]
    %v36 = vld [vmem:[%s1 + $0x4c] sm:$0xf]
    %v37 = vld [vmem:[%s1 + $0x50] sm:$0xf]
    %v38 = vld [vmem:[%s1 + $0x54] sm:$0xf]
    %v39 = vld [vmem:[%s1 + $0x58] sm:$0xf]
    %v40 = vld [vmem:[%s1 + $0x5c] sm:$0xf]
    %v41 = vld [vmem:[%s1 + $0x60] sm:$0xf]
    %v42 = vld [vmem:[%s1 + $0x64] sm:$0xf]
    %v43 = vld [vmem:[%s1 + $0x68] sm:$0xf]
    %v44 = vld [vmem:[%s1 + $0x6c] sm:$0xf]
    %v45 = vld [vmem:[%s1 + $0x70] sm:$0xf]
    %v46 = vld [vmem:[%s1 + $0x74] sm:$0xf]
    %v47 = vld [vmem:[%s1 + $0x78] sm:$0xf]
    %v48 = vld [vmem:[%s1 + $0x7c] sm:$0xf]
    %v49 = vld [vmem:[%s2] sm:$0x1]
    %v51 = vlaneseq
    %v52 = vshrl.u32 %v51, 7
    %v53 = vsub.s32 0, %v52
    %v54 = vrot.slane %v49, %v53
    %v57 = vunpack.c.l.b16 %v16
    %v58 = vunpack.c.h.b16 %v16
    %v59 = vpack.c.b16 %v57, %v57
    %v60 = vpack.c.b16 %v58, %v58
    %v95 = vunpack.c.l.b16 %v17
    %v96 = vunpack.c.l.b16 %v18
    %v97 = vunpack.c.l.b16 %v19
    %v98 = vunpack.c.l.b16 %v20
    %v99 = vunpack.c.l.b16 %v21
    %v100 = vunpack.c.l.b16 %v22
    %v101 = vunpack.c.l.b16 %v23
    %v102 = vunpack.c.l.b16 %v24
    %v103 = vunpack.c.l.b16 %v25
    %v104 = vunpack.c.l.b16 %v26
    %v105 = vunpack.c.l.b16 %v27
    %v106 = vunpack.c.l.b16 %v28
    %v107 = vunpack.c.l.b16 %v29
    %v108 = vunpack.c.l.b16 %v30
    %v109 = vunpack.c.l.b16 %v31
    %v110 = vunpack.c.l.b16 %v32
    %v111 = vunpack.c.l.b16 %v33
    %v112 = vunpack.c.l.b16 %v34
    %v113 = vunpack.c.l.b16 %v35
    %v114 = vunpack.c.l.b16 %v36
    %v115 = vunpack.c.l.b16 %v37
    %v116 = vunpack.c.l.b16 %v38
    %v117 = vunpack.c.l.b16 %v39
    %v118 = vunpack.c.l.b16 %v40
    %v119 = vunpack.c.l.b16 %v41
    %v120 = vunpack.c.l.b16 %v42
    %v121 = vunpack.c.l.b16 %v43
    %v122 = vunpack.c.l.b16 %v44
    %v123 = vunpack.c.l.b16 %v45
    %v124 = vunpack.c.l.b16 %v46
    %v125 = vunpack.c.l.b16 %v47
    %v126 = vunpack.c.l.b16 %v48
    %v127 = vpack.c.b16 %v96, %v95
    %v128 = vpack.c.b16 %v98, %v97
    %v129 = vpack.c.b16 %v100, %v99
    %v130 = vpack.c.b16 %v102, %v101
    %v131 = vpack.c.b16 %v104, %v103
    %v132 = vpack.c.b16 %v106, %v105
    %v133 = vpack.c.b16 %v108, %v107
    %v134 = vpack.c.b16 %v110, %v109
    %v135 = vpack.c.b16 %v112, %v111
    %v136 = vpack.c.b16 %v114, %v113
    %v137 = vpack.c.b16 %v116, %v115
    %v138 = vpack.c.b16 %v118, %v117
    %v139 = vpack.c.b16 %v120, %v119
    %v140 = vpack.c.b16 %v122, %v121
    %v141 = vpack.c.b16 %v124, %v123
    %v142 = vpack.c.b16 %v126, %v125
    %159 = vmatprep.subr.bf16.mxu0 0
    %160 = vmatpush1.bf16.msra.mxu0 %v127
    %161 = vmatprep.subr.bf16.mxu0 0
    %162 = vmatpush1.bf16.msra.mxu0 %v128
    %163 = vmatprep.subr.bf16.mxu0 0
    %164 = vmatpush1.bf16.msra.mxu0 %v129
    %165 = vmatprep.subr.bf16.mxu0 0
    %166 = vmatpush1.bf16.msra.mxu0 %v130
    %167 = vmatprep.subr.bf16.mxu0 0
    %168 = vmatpush1.bf16.msra.mxu0 %v131
    %169 = vmatprep.subr.bf16.mxu0 0
    %170 = vmatpush1.bf16.msra.mxu0 %v132
    %171 = vmatprep.subr.bf16.mxu0 0
    %172 = vmatpush1.bf16.msra.mxu0 %v133
    %173 = vmatprep.subr.bf16.mxu0 0
    %174 = vmatpush1.bf16.msra.mxu0 %v134
    %175 = vmatprep.subr.bf16.mxu0 0
    %176 = vmatpush1.bf16.msra.mxu0 %v135
    %177 = vmatprep.subr.bf16.mxu0 0
    %178 = vmatpush1.bf16.msra.mxu0 %v136
    %179 = vmatprep.subr.bf16.mxu0 0
    %180 = vmatpush1.bf16.msra.mxu0 %v137
    %181 = vmatprep.subr.bf16.mxu0 0
    %182 = vmatpush1.bf16.msra.mxu0 %v138
    %183 = vmatprep.subr.bf16.mxu0 0
    %184 = vmatpush1.bf16.msra.mxu0 %v139
    %185 = vmatprep.subr.bf16.mxu0 0
    %186 = vmatpush1.bf16.msra.mxu0 %v140
    %187 = vmatprep.subr.bf16.mxu0 0
    %188 = vmatpush1.bf16.msra.mxu0 %v141
    %189 = vmatprep.subr.bf16.mxu0 0
    %190 = vmatpush1.bf16.msra.mxu0 %v142
    %191 = vmatprep.mubr.bf16.mxu0 %v60
    %192 = vmatmul.mubr.bf16.gmra.mrb[0].mxu0 %v59
    %v193 = vpop.f32.mrb[0].mxu0
    %v194 = vadd.f32 %v54, %v193
    %v195 = vpop.f32.mrb[0].mxu0
    %v196 = vpop.f32.mrb[0].mxu0
    %v197 = vpop.f32.mrb[0].mxu0
    %198 = vdwg.mxu0
    %199 = vst [vmem:[#allocation2] sm:$0xff] %v194
    // Predicated region
    $region14: #{patch_embed_forward.1} parent=1 // pred_check
      _
    $region15: #{patch_embed_forward.1} parent=1 // pred_check_branch
      %201 = sbr.rel (0) target = $region17
    $region16: #{patch_embed_forward.1} parent=1 // pred_region
      %s203 = ssub.s32 128, 128
      %204 = vsyncadd [#allocation3], %s203
      %s206 = sshll.u32 [#allocation2], 4
      %s207 = int_to_ptr.vmem [resolvable:$true] %s206
      %209 = dma.vmem_to_hbm [thread:$0]  %s207, 128, %s3, [#allocation3]
    $region17: #{patch_embed_forward.1} parent=1 // pred_fallthru
      _
    // Predicated region
    $region18: #{patch_embed_forward.1} parent=1 // pred_check
      _
    $region19: #{patch_embed_forward.1} parent=1 // pred_check_branch
      %211 = sbr.rel (0) target = $region21
    $region20: #{patch_embed_forward.1} parent=1 // pred_region
      %212 = dma.done [#allocation3], 128
    $region21: #{patch_embed_forward.1} parent=1 // pred_fallthru
      _
    %213 = vsyncpa [#allocation3], 1

</llo_original>
